<compile_context>
chip_gen: v7x
topology: tpu7x:2x2x1
jax: 0.10.0
libtpu: 0.0.40
codegen_flags: <defaults>
</compile_context>

<pallas_src>
import math

import jax
import jax.numpy as jnp
from jax.experimental import pallas as pl
from jax.experimental.pallas import tpu as pltpu

_GELU_C = math.sqrt(2.0 / math.pi)


# ----------------------------- Pallas kernel --------------------------------

def _ffn_kernel(x_ref, w1_ref, b1_ref, w2_ref, b2_ref, o_ref, acc_ref):
    """One (row-tile i, hidden-tile j) grid step of the fused FFN.

    x_ref  : (tm, D)  bf16  activation row tile (same block for every j)
    w1_ref : (D, th)  bf16  W1 column slab for hidden tile j
    b1_ref : (1, th)  f32
    w2_ref : (th, D)  bf16  W2 row slab for hidden tile j
    b2_ref : (1, D)   f32
    o_ref  : (tm, D)  f32   output row tile (written at the last j only)
    acc_ref: (tm, D)  f32   VMEM accumulator, resident across the j axis
    """
    j = pl.program_id(1)

    @pl.when(j == 0)
    def _():
        acc_ref[...] = jnp.zeros_like(acc_ref)

    # First matmul (MXU, bf16 inputs, f32 accumulation) + bias.
    h = jnp.dot(x_ref[...], w1_ref[...], preferred_element_type=jnp.float32)
    h = h + b1_ref[...]

    # tanh-GELU in f32 — exactly the PyTorch GELU of the spec.
    g = 0.5 * h * (1.0 + jnp.tanh(_GELU_C * (h + 0.044715 * h * h * h)))

    # Second matmul: accumulate this hidden slab's contribution to the output.
    acc_ref[...] += jnp.dot(g.astype(w2_ref.dtype), w2_ref[...],
                            preferred_element_type=jnp.float32)

    @pl.when(j == pl.num_programs(1) - 1)
    def _():
        o_ref[...] = (acc_ref[...] + b2_ref[...]).astype(o_ref.dtype)


# ----------------------------- wrapper ---------------------------------------

def _round_up(x, m):
    return ((x + m - 1) // m) * m


def _pick_hidden_tile(hidden):
    # Largest lane-aligned tile that divides the hidden dim; fall back to full.
    for th in (512, 256, 128):
        if hidden % th == 0:
            return th
    return hidden


def feed_forward(x, w1, b1, w2, b2, *, tm_target=256,
                 compute_dtype=jnp.bfloat16):
    """y = GELU(x @ W1 + b1) @ W2 + b2 for x of shape (..., D)."""
    orig_shape = x.shape
    D = orig_shape[-1]
    H = w1.shape[1]
    assert w1.shape == (D, H) and w2.shape == (H, D)
    assert b1.shape == (H,) and b2.shape == (D,)

    x2 = x.reshape(-1, D)
    M = x2.shape[0]

    # Row tile: multiple of 8 sublanes; pad M so the grid divides evenly.
    tm = tm_target if M > tm_target else _round_up(M, 8)
    m_pad = _round_up(M, tm)
    if m_pad != M:
        x2 = jnp.pad(x2, ((0, m_pad - M), (0, 0)))

    th = _pick_hidden_tile(H)

    # bf16 MXU inputs; f32 biases / accumulator / output.
    x2 = x2.astype(compute_dtype)
    w1c = w1.astype(compute_dtype)
    w2c = w2.astype(compute_dtype)
    b1r = b1.astype(jnp.float32).reshape(1, H)
    b2r = b2.astype(jnp.float32).reshape(1, D)

    grid = (m_pad // tm, H // th)

    out = pl.pallas_call(
        _ffn_kernel,
        out_shape=jax.ShapeDtypeStruct((m_pad, D), jnp.float32),
        grid_spec=pltpu.PrefetchScalarGridSpec(
            num_scalar_prefetch=0,
            grid=grid,
            in_specs=[
                pl.BlockSpec((tm, D), lambda i, j: (i, 0)),   # x row tile
                pl.BlockSpec((D, th), lambda i, j: (0, j)),   # W1 column slab
                pl.BlockSpec((1, th), lambda i, j: (0, j)),   # b1 slab
                pl.BlockSpec((th, D), lambda i, j: (j, 0)),   # W2 row slab
                pl.BlockSpec((1, D), lambda i, j: (0, 0)),    # b2
            ],
            out_specs=pl.BlockSpec((tm, D), lambda i, j: (i, 0)),
            scratch_shapes=[pltpu.VMEM((tm, D), jnp.float32)],
        ),
        compiler_params=pltpu.CompilerParams(
            # Row tiles split across TensorCores; hidden axis is a reduction.
            dimension_semantics=("parallel", "arbitrary"),
            # Working set is a few MiB; explicit limit leaves headroom on v7x
            # (64 MiB physical) while staying under v5e's default ceilings.
            vmem_limit_bytes=32 * 1024 * 1024,
        ),
    )(x2, w1c, b1r, w2c, b2r)

    return out[:M].reshape(orig_shape[:-1] + (D,))


# ----------------------------- reference -------------------------------------

def _gelu_ref(x):
    return 0.5 * x * (1.0 + jnp.tanh(_GELU_C * (x + 0.044715 * x ** 3)))


def feed_forward_ref(x, w1, b1, w2, b2, compute_dtype=jnp.bfloat16):
    """Pure-JAX reference matching the kernel's bf16-input / f32-math recipe."""
    xf = x.astype(compute_dtype).astype(jnp.float32)
    w1f = w1.astype(compute_dtype).astype(jnp.float32)
    w2f = w2.astype(compute_dtype).astype(jnp.float32)
    h = xf @ w1f + b1.astype(jnp.float32)
    g = _gelu_ref(h).astype(compute_dtype).astype(jnp.float32)
    return g @ w2f + b2.astype(jnp.float32)


# ----------------------------- demo / test ------------------------------------

if __name__ == "__main__":
    key = jax.random.PRNGKey(0)

    # Small config consistent with the module: emb_dim=32, batch=2, seq=8.
    B, T, D = 2, 8, 32
    H = 4 * D

    k1, k2, k3, k4, k5 = jax.random.split(key, 5)
    x = jax.random.normal(k1, (B, T, D), dtype=jnp.float32)
    w1 = 0.02 * jax.random.normal(k2, (D, H), dtype=jnp.float32)
    b1 = 0.01 * jax.random.normal(k3, (H,), dtype=jnp.float32)
    w2 = 0.02 * jax.random.normal(k4, (H, D), dtype=jnp.float32)
    b2 = 0.01 * jax.random.normal(k5, (D,), dtype=jnp.float32)

    ffn = jax.jit(feed_forward)
    y = ffn(x, w1, b1, w2, b2)
    jax.block_until_ready(y)
    assert y.shape == (B, T, D) and y.dtype == jnp.float32
    y_ref = feed_forward_ref(x.reshape(-1, D), w1, b1, w2, b2).reshape(B, T, D)
    assert jnp.allclose(y, y_ref, atol=2e-2, rtol=2e-2), \
        float(jnp.max(jnp.abs(y - y_ref)))

    # Larger shape that exercises the multi-tile grid, the accumulator
    # init/finalize paths, and the row-padding logic (M not a tile multiple).
    D2, M2 = 256, 520
    H2 = 4 * D2
    kk = jax.random.split(jax.random.fold_in(key, 1), 5)
    x2 = jax.random.normal(kk[0], (M2, D2), dtype=jnp.float32)
    w1b = 0.02 * jax.random.normal(kk[1], (D2, H2), dtype=jnp.float32)
    b1b = 0.01 * jax.random.normal(kk[2], (H2,), dtype=jnp.float32)
    w2b = 0.02 * jax.random.normal(kk[3], (H2, D2), dtype=jnp.float32)
    b2b = 0.01 * jax.random.normal(kk[4], (D2,), dtype=jnp.float32)

    y2 = jax.jit(feed_forward)(x2, w1b, b1b, w2b, b2b)
    jax.block_until_ready(y2)
    assert y2.shape == (M2, D2) and y2.dtype == jnp.float32
    y2_ref = feed_forward_ref(x2, w1b, b1b, w2b, b2b)
    assert jnp.allclose(y2, y2_ref, atol=2e-2, rtol=2e-2), \
        float(jnp.max(jnp.abs(y2 - y2_ref)))

    print("KERNEL_OK")
</pallas_src>

<mosaic_0001>
module attributes {stable_mosaic.version = 11 : i64} {
  func.func @_ffn_kernel(%arg0: i32, %arg1: i32, %arg2: memref<16x32xbf16, #tpu.memory_space<vmem>>, %arg3: memref<32x128xbf16, #tpu.memory_space<vmem>>, %arg4: memref<1x128xf32, #tpu.memory_space<vmem>>, %arg5: memref<128x32xbf16, #tpu.memory_space<vmem>>, %arg6: memref<1x32xf32, #tpu.memory_space<vmem>>, %arg7: memref<16x32xf32, #tpu.memory_space<vmem>>, %arg8: memref<16x32xf32, #tpu.memory_space<vmem>>) attributes {dimension_semantics = [#tpu.dimension_semantics<parallel>, #tpu.dimension_semantics<arbitrary>], iteration_bounds = array<i64: 1, 1>, scalar_prefetch = 0 : i64, scratch_operands = 1 : i64, tpu.core_type = #tpu.core_type<tc>, window_params = [{transform_indices = @transform_0, window_bounds = array<i64: 16, 32>}, {transform_indices = @transform_1, window_bounds = array<i64: 32, 128>}, {transform_indices = @transform_2, window_bounds = array<i64: 1, 128>}, {transform_indices = @transform_3, window_bounds = array<i64: 128, 32>}, {pipeline_mode = #tpu.pipeline_mode<synchronous>, transform_indices = @transform_4, window_bounds = array<i64: 1, 32>}, {transform_indices = @transform_5, window_bounds = array<i64: 16, 32>}]} {
    %c0_i32 = arith.constant 0 : i32
    %0 = arith.cmpi eq, %arg1, %c0_i32 : i32
    %1 = arith.extui %0 : i1 to i32
    %c0_i32_0 = arith.constant 0 : i32
    %2 = arith.cmpi ne, %1, %c0_i32_0 : i32
    scf.if %2 {
      %cst_19 = arith.constant 0.000000e+00 : f32
      %31 = vector.broadcast %cst_19 : f32 to vector<16x32xf32>
      %c0_20 = arith.constant 0 : index
      %c0_21 = arith.constant 0 : index
      %32 = vector.load %arg8[%c0_20, %c0_21] : memref<16x32xf32, #tpu.memory_space<vmem>>, vector<16x32xf32>
      tpu.vector_store %arg8[%c0_20, %c0_21], %31 {strides = array<i32>} : memref<16x32xf32, #tpu.memory_space<vmem>>, vector<16x32xf32>,
    } else {
    }
    %c0 = arith.constant 0 : index
    %c0_1 = arith.constant 0 : index
    %3 = vector.load %arg2[%c0, %c0_1] : memref<16x32xbf16, #tpu.memory_space<vmem>>, vector<16x32xbf16>
    %c0_2 = arith.constant 0 : index
    %c0_3 = arith.constant 0 : index
    %4 = vector.load %arg3[%c0_2, %c0_3] : memref<32x128xbf16, #tpu.memory_space<vmem>>, vector<32x128xbf16>
    %cst = arith.constant dense<0.000000e+00> : vector<16x128xf32>
    %5 = tpu.matmul %3, %4, %cst {dimension_numbers = #tpu.dot_dimension_numbers<[1], [0], [0], [1], [0, 0, 1, 1], [], []>} : vector<16x32xbf16>, vector<32x128xbf16>, vector<16x128xf32> -> vector<16x128xf32>
    %c0_4 = arith.constant 0 : index
    %c0_5 = arith.constant 0 : index
    %6 = vector.load %arg4[%c0_4, %c0_5] : memref<1x128xf32, #tpu.memory_space<vmem>>, vector<1x128xf32>
    %7 = vector.broadcast %6 : vector<1x128xf32> to vector<16x128xf32>
    %8 = arith.addf %5, %7 : vector<16x128xf32>
    %cst_6 = arith.constant 5.000000e-01 : f32
    %9 = vector.broadcast %cst_6 : f32 to vector<16x128xf32>
    %10 = arith.mulf %9, %8 : vector<16x128xf32>
    %cst_7 = arith.constant 4.471500e-02 : f32
    %11 = vector.broadcast %cst_7 : f32 to vector<16x128xf32>
    %12 = arith.mulf %11, %8 : vector<16x128xf32>
    %13 = arith.mulf %12, %8 : vector<16x128xf32>
    %14 = arith.mulf %13, %8 : vector<16x128xf32>
    %15 = arith.addf %8, %14 : vector<16x128xf32>
    %cst_8 = arith.constant 0.797884583 : f32
    %16 = vector.broadcast %cst_8 : f32 to vector<16x128xf32>
    %17 = arith.mulf %16, %15 : vector<16x128xf32>
    %18 = math.tanh %17 : vector<16x128xf32>
    %cst_9 = arith.constant 1.000000e+00 : f32
    %19 = vector.broadcast %cst_9 : f32 to vector<16x128xf32>
    %20 = arith.addf %19, %18 : vector<16x128xf32>
    %21 = arith.mulf %10, %20 : vector<16x128xf32>
    %c0_10 = arith.constant 0 : index
    %c0_11 = arith.constant 0 : index
    %22 = vector.load %arg8[%c0_10, %c0_11] : memref<16x32xf32, #tpu.memory_space<vmem>>, vector<16x32xf32>
    %23 = arith.truncf %21 : vector<16x128xf32> to vector<16x128xbf16>
    %c0_12 = arith.constant 0 : index
    %c0_13 = arith.constant 0 : index
    %24 = vector.load %arg5[%c0_12, %c0_13] : memref<128x32xbf16, #tpu.memory_space<vmem>>, vector<128x32xbf16>
    %cst_14 = arith.constant dense<0.000000e+00> : vector<16x32xf32>
    %25 = tpu.matmul %23, %24, %cst_14 {dimension_numbers = #tpu.dot_dimension_numbers<[1], [0], [0], [1], [0, 0, 1, 1], [], []>} : vector<16x128xbf16>, vector<128x32xbf16>, vector<16x32xf32> -> vector<16x32xf32>
    %26 = arith.addf %22, %25 : vector<16x32xf32>
    %c0_15 = arith.constant 0 : index
    %c0_16 = arith.constant 0 : index
    %27 = vector.load %arg8[%c0_15, %c0_16] : memref<16x32xf32, #tpu.memory_space<vmem>>, vector<16x32xf32>
    tpu.vector_store %arg8[%c0_15, %c0_16], %26 {strides = array<i32>} : memref<16x32xf32, #tpu.memory_space<vmem>>, vector<16x32xf32>,
    %c0_i32_17 = arith.constant 0 : i32
    %28 = arith.cmpi eq, %arg1, %c0_i32_17 : i32
    %29 = arith.extui %28 : i1 to i32
    %c0_i32_18 = arith.constant 0 : i32
    %30 = arith.cmpi ne, %29, %c0_i32_18 : i32
    scf.if %30 {
      %c0_19 = arith.constant 0 : index
      %c0_20 = arith.constant 0 : index
      %31 = vector.load %arg8[%c0_19, %c0_20] : memref<16x32xf32, #tpu.memory_space<vmem>>, vector<16x32xf32>
      %c0_21 = arith.constant 0 : index
      %c0_22 = arith.constant 0 : index
      %32 = vector.load %arg6[%c0_21, %c0_22] : memref<1x32xf32, #tpu.memory_space<vmem>>, vector<1x32xf32>
      %33 = vector.broadcast %32 : vector<1x32xf32> to vector<16x32xf32>
      %34 = arith.addf %31, %33 : vector<16x32xf32>
      %c0_23 = arith.constant 0 : index
      %c0_24 = arith.constant 0 : index
      %35 = vector.load %arg7[%c0_23, %c0_24] : memref<16x32xf32, #tpu.memory_space<vmem>>, vector<16x32xf32>
      tpu.vector_store %arg7[%c0_23, %c0_24], %34 {strides = array<i32>} : memref<16x32xf32, #tpu.memory_space<vmem>>, vector<16x32xf32>,
    } else {
    }
    return
  }
  func.func @transform_0(%arg0: i32, %arg1: i32) -> (i32, i32) {
    %c0_i32 = arith.constant 0 : i32
    %c0_i32_0 = arith.constant 0 : i32
    return %arg0, %c0_i32 : i32, i32
  }
  func.func @transform_1(%arg0: i32, %arg1: i32) -> (i32, i32) {
    %c0_i32 = arith.constant 0 : i32
    %c0_i32_0 = arith.constant 0 : i32
    return %c0_i32, %arg1 : i32, i32
  }
  func.func @transform_2(%arg0: i32, %arg1: i32) -> (i32, i32) {
    %c0_i32 = arith.constant 0 : i32
    %c0_i32_0 = arith.constant 0 : i32
    return %c0_i32, %arg1 : i32, i32
  }
  func.func @transform_3(%arg0: i32, %arg1: i32) -> (i32, i32) {
    %c0_i32 = arith.constant 0 : i32
    %c0_i32_0 = arith.constant 0 : i32
    return %arg1, %c0_i32 : i32, i32
  }
  func.func @transform_4(%arg0: i32, %arg1: i32) -> (i32, i32) {
    %c0_i32 = arith.constant 0 : i32
    %c0_i32_0 = arith.constant 0 : i32
    %c0_i32_1 = arith.constant 0 : i32
    return %c0_i32, %c0_i32_0 : i32, i32
  }
  func.func @transform_5(%arg0: i32, %arg1: i32) -> (i32, i32) {
    %c0_i32 = arith.constant 0 : i32
    %c0_i32_0 = arith.constant 0 : i32
    return %arg0, %c0_i32 : i32, i32
  }
}

</mosaic_0001>

<llo_original>
// kernel: feed_forward.1
$region0: #{feed_forward.1}
  #allocation0 [shape = 'u32[]', space=smem, size = 0x4, offset = 0x4, fixed_abs, tag = 'smem constant byte address 0x4 - core index']
  #allocation1 [shape = 'u32[144,128]{1,0:T(1,128)}', space=vmem, size = 0x12000, scoped, tag = 'internal scratch']
  #allocation2 [shape = 'f32[16,32]{1,0:T(8,128)}', space=vmem, size = 0x2000, scoped, tag = 'scratch operand']
  %s0 = inlined_call_operand.vmem [shape: bf16[16,32], index: 0, kind: input, shape index: {}]
  %s1 = inlined_call_operand.vmem [shape: bf16[32,128], index: 1, kind: input, shape index: {}]
  %s2 = inlined_call_operand.vmem [shape: f32[1,128], index: 2, kind: input, shape index: {}]
  %s3 = inlined_call_operand.vmem [shape: bf16[128,32], index: 3, kind: input, shape index: {}]
  %s4 = inlined_call_operand.vmem [shape: f32[1,32], index: 4, kind: input, shape index: {}]
  %s5 = inlined_call_operand.hbm [shape: f32[16,32], index: 5, kind: output, shape index: {}]
  %s6 = sld [smem:[#allocation0]]
  $region38: #{feed_forward.1} parent=0
    _
  %s8 = ssub.s32 1, %s6
  %s9 = scalar_select 0, %s8, %s6
  $region1: #{feed_forward.1} parent=0
    #allocation3 [shape = 'u8[8192]{0}', space=vmem, size = 0x2000, scoped, tag = 'output window, operand 0, single buffered']
    #allocation4 [shape = 's32[1]{0}', space=sflag, size = 0x4, scoped, tag = 'scoped memory for feed_forward.1']
    %10 = vsyncpa [#allocation4], 0
    // Predicated region
    $region2: #{feed_forward.1} parent=1 // pred_check
      _
    $region3: #{feed_forward.1} parent=1 // pred_check_branch
      %12 = sbr.rel (0) target = $region5
    $region4: #{feed_forward.1} parent=1 // pred_region
      _
    $region5: #{feed_forward.1} parent=1 // pred_fallthru
      _
    // Predicated region
    $region6: #{feed_forward.1} parent=1 // pred_check
      _
    $region7: #{feed_forward.1} parent=1 // pred_check_branch
      %14 = sbr.rel (0) target = $region9
    $region8: #{feed_forward.1} parent=1 // pred_region
      _
    $region9: #{feed_forward.1} parent=1 // pred_fallthru
      _
    // Predicated region
    $region10: #{feed_forward.1} parent=1 // pred_check
      _
    $region11: #{feed_forward.1} parent=1 // pred_check_branch
      %16 = sbr.rel (0) target = $region13
    $region12: #{feed_forward.1} parent=1 // pred_region
      _
    $region13: #{feed_forward.1} parent=1 // pred_fallthru
      _
    // Predicated region
    $region14: #{feed_forward.1} parent=1 // pred_check
      _
    $region15: #{feed_forward.1} parent=1 // pred_check_branch
      %18 = sbr.rel (0) target = $region17
    $region16: #{feed_forward.1} parent=1 // pred_region
      _
    $region17: #{feed_forward.1} parent=1 // pred_fallthru
      _
    // Predicated region
    $region18: #{feed_forward.1} parent=1 // pred_check
      _
    $region19: #{feed_forward.1} parent=1 // pred_check_branch
      %20 = sbr.rel (0) target = $region21
    $region20: #{feed_forward.1} parent=1 // pred_region
      _
    $region21: #{feed_forward.1} parent=1 // pred_fallthru
      _
    %p22 = scmp.eq.s32.totalorder 0, 0
    // Predicated region
    $region22: #{feed_forward.1} parent=1 // pred_check
      %p23 = pneg %p22
    $region23: #{feed_forward.1} parent=1 // pred_check_branch
      %25 = sbr.rel (%p23) target = $region25
    $region24: #{feed_forward.1} parent=1 // pred_region
      %vm26 = vcmask 261120
      %27 = vst.msk [vmem:[#allocation2] sm:$0xff] %vm26, 0.0
      %28 = vst.msk [vmem:[#allocation2 + $0x8] sm:$0xff] %vm26, 0.0
    $region25: #{feed_forward.1} parent=1 // pred_fallthru
      _
    %v29 = vld [vmem:[%s0] sm:$0xf]
    %v30 = vld [vmem:[%s0 + $0x4] sm:$0xf]
    %v31 = vld [vmem:[%s1] sm:$0xf]
    %v32 = vld [vmem:[%s1 + $0x4] sm:$0xf]
    %v33 = vld [vmem:[%s1 + $0x8] sm:$0xf]
    %v34 = vld [vmem:[%s1 + $0xc] sm:$0xf]
    %v35 = vld [vmem:[%s2] sm:$0x1]
    %v37 = vlaneseq
    %v38 = vshrl.u32 %v37, 7
    %v39 = vsub.s32 0, %v38
    %v40 = vrot.slane %v35, %v39
    %v44 = vunpack.c.l.b16 %v29
    %v45 = vunpack.c.l.b16 %v30
    %v46 = vpack.c.b16 %v45, %v44
    %v51 = vunpack.c.l.b16 %v31
    %v52 = vunpack.c.l.b16 %v32
    %v53 = vunpack.c.l.b16 %v33
    %v54 = vunpack.c.l.b16 %v34
    %v55 = vpack.c.b16 %v52, %v51
    %v56 = vpack.c.b16 %v54, %v53
    %vm59 = vcmask 261120
    %v61 = vsel %vm59, %v46, 0
    %63 = vmatprep.subr.bf16.mxu0 0
    %64 = vmatpush1.bf16.msra.mxu0 %v55
    %65 = vmatprep.subr.bf16.mxu0 0
    %66 = vmatpush1.bf16.msra.mxu0 %v56
    %67 = vmatprep.subr.bf16.mxu0 0
    %68 = vmatpush1.bf16.msra.mxu0 0
    %69 = vmatprep.subr.bf16.mxu0 0
    %70 = vmatpush1.bf16.msra.mxu0 0
    %71 = vmatprep.subr.bf16.mxu0 0
    %72 = vmatpush1.bf16.msra.mxu0 0
    %73 = vmatprep.subr.bf16.mxu0 0
    %74 = vmatpush1.bf16.msra.mxu0 0
    %75 = vmatprep.subr.bf16.mxu0 0
    %76 = vmatpush1.bf16.msra.mxu0 0
    %77 = vmatprep.subr.bf16.mxu0 0
    %78 = vmatpush1.bf16.msra.mxu0 0
    %79 = vmatprep.subr.bf16.mxu0 0
    %80 = vmatpush1.bf16.msra.mxu0 0
    %81 = vmatprep.subr.bf16.mxu0 0
    %82 = vmatpush1.bf16.msra.mxu0 0
    %83 = vmatprep.subr.bf16.mxu0 0
    %84 = vmatpush1.bf16.msra.mxu0 0
    %85 = vmatprep.subr.bf16.mxu0 0
    %86 = vmatpush1.bf16.msra.mxu0 0
    %87 = vmatprep.subr.bf16.mxu0 0
    %88 = vmatpush1.bf16.msra.mxu0 0
    %89 = vmatprep.subr.bf16.mxu0 0
    %90 = vmatpush1.bf16.msra.mxu0 0
    %91 = vmatprep.subr.bf16.mxu0 0
    %92 = vmatpush1.bf16.msra.mxu0 0
    %93 = vmatprep.subr.bf16.mxu0 0
    %94 = vmatpush1.bf16.msra.mxu0 0
    %95 = vmatprep.mubr.bf16.mxu0 0
    %96 = vmatmul.mubr.bf16.gmra.mrb[0].mxu0 %v61
    %v97 = vpop.f32.mrb[0].mxu0
    %v98 = vadd.f32 %v40, %v97
    %v99 = vpop.f32.mrb[0].mxu0
    %v100 = vpop.f32.mrb[0].mxu0
    %v101 = vadd.f32 %v40, %v100
    %v102 = vpop.f32.mrb[0].mxu0
    %103 = vdwg.mxu0
    %v104 = vmul.f32 %v98, 0.5
    %v105 = vmul.f32 %v101, 0.5
    %v106 = vmul.f32 %v98, 0.044715
    %v107 = vmul.f32 %v101, 0.044715
    %v108 = vmul.f32 %v106, %v98
    %v109 = vmul.f32 %v107, %v101
    %v110 = vmul.f32 %v108, %v98
    %v111 = vmul.f32 %v109, %v101
    %v112 = vadd.f32 %v98, %v110
    %v113 = vadd.f32 %v101, %v111
    %v114 = vmul.f32 %v112, 0.7978846
    %v115 = vmul.f32 %v113, 0.7978846
    %v116 = vtanh.pop %v114
    %v117 = vtanh.pop %v115
    %v118 = vadd.f32 %v116, 1.0
    %v119 = vadd.f32 %v117, 1.0
    %v120 = vmul.f32 %v104, %v118
    %v121 = vmul.f32 %v105, %v119
    %v122 = vld [vmem:[#allocation2] sm:$0xff]
    %v123 = vld [vmem:[#allocation2 + $0x8] sm:$0xff]
    %v124 = vpack.c.bf16 %v121, %v120
    %v125 = vld [vmem:[%s3] sm:$0xf]
    %v126 = vld [vmem:[%s3 + $0x4] sm:$0xf]
    %v127 = vld [vmem:[%s3 + $0x8] sm:$0xf]
    %v128 = vld [vmem:[%s3 + $0xc] sm:$0xf]
    %v129 = vld [vmem:[%s3 + $0x10] sm:$0xf]
    %v130 = vld [vmem:[%s3 + $0x14] sm:$0xf]
    %v131 = vld [vmem:[%s3 + $0x18] sm:$0xf]
    %v132 = vld [vmem:[%s3 + $0x1c] sm:$0xf]
    %v133 = vld [vmem:[%s3 + $0x20] sm:$0xf]
    %v134 = vld [vmem:[%s3 + $0x24] sm:$0xf]
    %v135 = vld [vmem:[%s3 + $0x28] sm:$0xf]
    %v136 = vld [vmem:[%s3 + $0x2c] sm:$0xf]
    %v137 = vld [vmem:[%s3 + $0x30] sm:$0xf]
    %v138 = vld [vmem:[%s3 + $0x34] sm:$0xf]
    %v139 = vld [vmem:[%s3 + $0x38] sm:$0xf]
    %v140 = vld [vmem:[%s3 + $0x3c] sm:$0xf]
    %v157 = vunpack.c.l.b16 %v125
    %v158 = vunpack.c.l.b16 %v126
    %v159 = vunpack.c.l.b16 %v127
    %v160 = vunpack.c.l.b16 %v128
    %v161 = vunpack.c.l.b16 %v129
    %v162 = vunpack.c.l.b16 %v130
    %v163 = vunpack.c.l.b16 %v131
    %v164 = vunpack.c.l.b16 %v132
    %v165 = vunpack.c.l.b16 %v133
    %v166 = vunpack.c.l.b16 %v134
    %v167 = vunpack.c.l.b16 %v135
    %v168 = vunpack.c.l.b16 %v136
    %v169 = vunpack.c.l.b16 %v137
    %v170 = vunpack.c.l.b16 %v138
    %v171 = vunpack.c.l.b16 %v139
    %v172 = vunpack.c.l.b16 %v140
    %v173 = vpack.c.b16 %v158, %v157
    %v174 = vpack.c.b16 %v160, %v159
    %v175 = vpack.c.b16 %v162, %v161
    %v176 = vpack.c.b16 %v164, %v163
    %v177 = vpack.c.b16 %v166, %v165
    %v178 = vpack.c.b16 %v168, %v167
    %v179 = vpack.c.b16 %v170, %v169
    %v180 = vpack.c.b16 %v172, %v171
    %189 = vmatprep.subr.bf16.mxu0 0
    %190 = vmatpush1.bf16.msra.mxu0 %v173
    %191 = vmatprep.subr.bf16.mxu0 0
    %192 = vmatpush1.bf16.msra.mxu0 %v174
    %193 = vmatprep.subr.bf16.mxu0 0
    %194 = vmatpush1.bf16.msra.mxu0 %v175
    %195 = vmatprep.subr.bf16.mxu0 0
    %196 = vmatpush1.bf16.msra.mxu0 %v176
    %197 = vmatprep.subr.bf16.mxu0 0
    %198 = vmatpush1.bf16.msra.mxu0 %v177
    %199 = vmatprep.subr.bf16.mxu0 0
    %200 = vmatpush1.bf16.msra.mxu0 %v178
    %201 = vmatprep.subr.bf16.mxu0 0
    %202 = vmatpush1.bf16.msra.mxu0 %v179
    %203 = vmatprep.subr.bf16.mxu0 0
    %204 = vmatpush1.bf16.msra.mxu0 %v180
    %205 = vmatprep.subr.bf16.mxu0 0
    %206 = vmatpush1.bf16.msra.mxu0 0
    %207 = vmatprep.subr.bf16.mxu0 0
    %208 = vmatpush1.bf16.msra.mxu0 0
    %209 = vmatprep.subr.bf16.mxu0 0
    %210 = vmatpush1.bf16.msra.mxu0 0
    %211 = vmatprep.subr.bf16.mxu0 0
    %212 = vmatpush1.bf16.msra.mxu0 0
    %213 = vmatprep.subr.bf16.mxu0 0
    %214 = vmatpush1.bf16.msra.mxu0 0
    %215 = vmatprep.subr.bf16.mxu0 0
    %216 = vmatpush1.bf16.msra.mxu0 0
    %217 = vmatprep.subr.bf16.mxu0 0
    %218 = vmatpush1.bf16.msra.mxu0 0
    %219 = vmatprep.subr.bf16.mxu0 0
    %220 = vmatpush1.bf16.msra.mxu0 0
    %221 = vmatprep.mubr.bf16.mxu0 0
    %222 = vmatmul.mubr.bf16.gmra.mrb[0].mxu0 %v124
    %v223 = vpop.f32.mrb[0].mxu0
    %v224 = vadd.f32 0.0, %v223
    %v225 = vpop.f32.mrb[0].mxu0
    %v226 = vpop.f32.mrb[0].mxu0
    %v227 = vadd.f32 0.0, %v226
    %v228 = vpop.f32.mrb[0].mxu0
    %229 = vdwg.mxu0
    %v230 = vadd.f32 %v122, %v224
    %v231 = vadd.f32 %v123, %v227
    %232 = vst.msk [vmem:[#allocation2] sm:$0xff] %vm59, %v230
    %233 = vst.msk [vmem:[#allocation2 + $0x8] sm:$0xff] %vm59, %v231
    // Predicated region
    $region26: #{feed_forward.1} parent=1 // pred_check
      %p234 = pneg %p22
    $region27: #{feed_forward.1} parent=1 // pred_check_branch
      %236 = sbr.rel (%p234) target = $region29
    $region28: #{feed_forward.1} parent=1 // pred_region
      %v237 = vld [vmem:[#allocation2] sm:$0xff]
      %v238 = vld [vmem:[#allocation2 + $0x8] sm:$0xff]
      %v239 = vld [vmem:[%s4] sm:$0x1]
      %v241 = vlaneseq
      %v242 = vshrl.u32 %v241, 7
      %v243 = vsub.s32 0, %v242
      %v244 = vrot.slane %v239, %v243
      %v246 = vadd.f32 %v237, %v244
      %v247 = vadd.f32 %v238, %v244
      %248 = vst.msk [vmem:[#allocation3] sm:$0xff] %vm59, %v246
      %249 = vst.msk [vmem:[#allocation3 + $0x8] sm:$0xff] %vm59, %v247
    $region29: #{feed_forward.1} parent=1 // pred_fallthru
      _
    // Predicated region
    $region30: #{feed_forward.1} parent=1 // pred_check
      _
    $region31: #{feed_forward.1} parent=1 // pred_check_branch
      %251 = sbr.rel (0) target = $region33
    $region32: #{feed_forward.1} parent=1 // pred_region
      %s253 = ssub.s32 256, 256
      %254 = vsyncadd [#allocation4], %s253
      %s255 = sshll.u32 [#allocation3], 4
      %s256 = int_to_ptr.vmem [resolvable:$true] %s255
      %261 = dma.vmem_to_hbm [thread:$0]  %s256, 256, %s5, [#allocation4], 128, 128, 8
    $region33: #{feed_forward.1} parent=1 // pred_fallthru
      _
    // Predicated region
    $region34: #{feed_forward.1} parent=1 // pred_check
      _
    $region35: #{feed_forward.1} parent=1 // pred_check_branch
      %263 = sbr.rel (0) target = $region37
    $region36: #{feed_forward.1} parent=1 // pred_region
      %264 = dma.done [#allocation4], 256
    $region37: #{feed_forward.1} parent=1 // pred_fallthru
      _
    %265 = vsyncpa [#allocation4], 1

</llo_original>
